<compile_context>
chip_gen: v6e
topology: v6e:2x2x1
jax: 0.10.0
libtpu: 0.0.40
codegen_flags: <defaults>
</compile_context>

<pallas_src>
import functools

import jax
import jax.numpy as jnp
from jax.experimental import pallas as pl
from jax.experimental.pallas import tpu as pltpu


def _round_up(a, b):
    return (a + b - 1) // b * b


# ----------------------------------------------------------------------------
# Parameter init (deterministic, mimics GlorotOrthogonal from the reference).
# ----------------------------------------------------------------------------
def glorot_orthogonal(key, shape, scale=2.0, dtype=jnp.float32):
    """Orthogonal matrix rescaled so Var(W) = scale / (fan_in + fan_out)."""
    fan_out, fan_in = shape  # torch Linear weight layout: (out, in)
    a = jax.random.normal(key, (max(shape), min(shape)), dtype=jnp.float32)
    q, r = jnp.linalg.qr(a)
    q = q * jnp.sign(jnp.diag(r))[None, :]  # sign fix for unique decomposition
    w = q[: shape[0], : shape[1]] if q.shape == shape else q.T[: shape[0], : shape[1]]
    w = w * jnp.sqrt(scale / ((fan_in + fan_out) * jnp.var(w)))
    return w.astype(dtype)


# ----------------------------------------------------------------------------
# Best-effort hardware queries (safe fallbacks everywhere).
# ----------------------------------------------------------------------------
def _tpu_info():
    try:
        return pltpu.get_tpu_info()
    except Exception:
        return None


def _device_kind():
    try:
        return jax.devices()[0].device_kind.lower()
    except Exception:
        return ""


def _vmem_capacity_bytes(info):
    if info is not None:
        v = getattr(info, "vmem_capacity_bytes", None)
        if isinstance(v, int) and v > 0:
            return v
    kind = _device_kind()
    if "v7" in kind:
        return 64 * 1024 * 1024
    if kind:                      # v5e / v6e (and most others): 128 MiB per TC
        return 128 * 1024 * 1024
    return 64 * 1024 * 1024       # unknown -> conservative


def _num_tensorcores(info):
    for name in ("num_cores", "core_count", "num_tensorcores", "tensorcores_per_chip"):
        v = getattr(info, name, None)
        if isinstance(v, int) and v > 0:
            return v
    return 2 if "v7" in _device_kind() else 1


def _default_act_dtype(compute_dtype):
    # bf16 transcendentals double EUP throughput on v6e/v7x; v5e has no bf16 EUP.
    if jnp.dtype(compute_dtype) == jnp.dtype(jnp.float32):
        return jnp.dtype(jnp.float32)
    if "v5" in _device_kind():
        return jnp.dtype(jnp.float32)
    return jnp.dtype(compute_dtype)


# ----------------------------------------------------------------------------
# Parameter prep (hoisted out of the hot path: transpose + cast done once).
# ----------------------------------------------------------------------------
def prepare_params(w1, b1, w2, b2, *, compute_dtype=jnp.bfloat16):
    """Torch-layout (out, in) weights -> (in, out) in the MXU compute dtype."""
    units = w1.shape[0]
    return dict(
        w1_t=jnp.asarray(w1).T.astype(compute_dtype),
        b1=jnp.asarray(b1).reshape(1, units).astype(jnp.float32),
        w2_t=jnp.asarray(w2).T.astype(compute_dtype),
        b2=jnp.asarray(b2).reshape(1, units).astype(jnp.float32),
        compute_dtype=jnp.dtype(compute_dtype),
    )


# ----------------------------------------------------------------------------
# Pallas kernel: fused dense -> act -> dense -> act -> residual add.
# ----------------------------------------------------------------------------
def _residual_kernel(x_ref, w1_ref, b1_ref, w2_ref, b2_ref, o_ref, *,
                     activation, compute_dtype, act_dtype):
    # x arrives as f32; cast only as the MXU operand (skip path stays exact).
    xc = x_ref[...].astype(compute_dtype)

    # dense_1 (+ bias) -- MXU matmul with f32 accumulation
    h = jnp.dot(xc, w1_ref[...], preferred_element_type=jnp.float32) + b1_ref[...]
    if activation is not None:
        h = activation(h.astype(act_dtype))
    h = h.astype(compute_dtype)

    # dense_2 (+ bias)
    y = jnp.dot(h, w2_ref[...], preferred_element_type=jnp.float32) + b2_ref[...]
    if activation is not None:
        y = activation(y.astype(act_dtype))

    # residual add in f32 against a fresh read of the f32 x tile
    o_ref[...] = (x_ref[...] + y.astype(jnp.float32)).astype(o_ref.dtype)


def residual_layer(x2d, params, *, activation=None, out_dtype=None,
                   act_dtype=None, tile_rows=None):
    """x2d: [N, units] (any float dtype; kept as-is through HBM).
    params: output of prepare_params()."""
    n, units = x2d.shape
    compute_dtype = jnp.dtype(params["compute_dtype"])
    out_dtype = jnp.dtype(out_dtype) if out_dtype is not None else jnp.dtype(x2d.dtype)
    act_dtype = (jnp.dtype(act_dtype) if act_dtype is not None
                 else _default_act_dtype(compute_dtype))

    info = _tpu_info()
    vmem_cap = _vmem_capacity_bytes(info)
    n_cores = _num_tensorcores(info)

    cbytes = compute_dtype.itemsize
    obytes = out_dtype.itemsize
    xbytes = jnp.dtype(x2d.dtype).itemsize

    # ---- row tile sizing: ~2 MiB of x per tile, clamped by the VMEM budget ---
    if tile_rows is None:
        tile_rows = max(1024, (2 << 20) // max(units * xbytes, 1))
    tile = min(_round_up(max(int(tile_rows), 8), 8), _round_up(n, 8))

    def vmem_need(t):
        return (2 * t * units * xbytes            # x tiles (double-buffered)
                + 2 * t * units * obytes          # out tiles (double-buffered)
                + 2 * units * units * cbytes      # W1^T + W2^T (single-buffered)
                + 2 * units * 4                   # biases (f32)
                + 4 * t * units * 4)              # f32 intermediates (h, y, ...)

    budget = int(0.85 * vmem_cap)
    while tile > 8 and vmem_need(tile) > budget:
        tile = _round_up(tile // 2, 8)

    # ---- balance the grid: minimize last-tile padding; on 2-TC parts make the
    # step count a multiple of the core count so both TensorCores get work -----
    steps = max(pl.cdiv(n, tile), 1)
    if n_cores >= 2:
        steps = _round_up(steps, n_cores)
    tile = _round_up(pl.cdiv(n, steps), 8)
    n_pad = _round_up(n, tile)
    grid = (n_pad // tile,)

    vmem_limit = int(min(max(1.25 * vmem_need(tile), 32 * 1024 * 1024),
                         0.85 * vmem_cap))

    x_in = x2d
    if n_pad != n:
        x_in = jnp.pad(x_in, ((0, n_pad - n), (0, 0)))

    resident = dict(pipeline_mode=pl.Buffered(1))  # constant index_map -> 1 buffer
    kernel = functools.partial(_residual_kernel, activation=activation,
                               compute_dtype=compute_dtype, act_dtype=act_dtype)

    # TODO(synk): enable input_output_aliases={0: 0} when the caller donates x
    # and out_dtype == x.dtype (saves an HBM allocation); skipped so x stays live.
    out = pl.pallas_call(
        kernel,
        out_shape=jax.ShapeDtypeStruct((n_pad, units), out_dtype),
        grid_spec=pltpu.PrefetchScalarGridSpec(
            num_scalar_prefetch=0,
            grid=grid,
            in_specs=[
                pl.BlockSpec((tile, units), lambda i: (i, 0)),               # x tile (f32)
                pl.BlockSpec((units, units), lambda i: (0, 0), **resident),  # W1^T
                pl.BlockSpec((1, units), lambda i: (0, 0), **resident),      # b1
                pl.BlockSpec((units, units), lambda i: (0, 0), **resident),  # W2^T
                pl.BlockSpec((1, units), lambda i: (0, 0), **resident),      # b2
            ],
            out_specs=pl.BlockSpec((tile, units), lambda i: (i, 0)),
        ),
        compiler_params=pltpu.CompilerParams(
            dimension_semantics=("parallel",),
            vmem_limit_bytes=vmem_limit,
        ),
    )(x_in, params["w1_t"], params["b1"], params["w2_t"], params["b2"])

    return out[:n] if n_pad != n else out


def residual_layer_ref(x2d, w1, b1, w2, b2, activation=None):
    h = x2d @ w1.T + b1
    if activation is not None:
        h = activation(h)
    y = h @ w2.T + b2
    if activation is not None:
        y = activation(y)
    return x2d + y


if __name__ == "__main__":
    units = 128           # DimeNet-style hidden size; multiple of 128 -> lane-dense
    batch, seq = 2, 8     # -> 16 rows after flattening

    key = jax.random.PRNGKey(0)
    kx, kw1, kw2 = jax.random.split(key, 3)

    x = jax.random.normal(kx, (batch, seq, units), dtype=jnp.float32)

    # Parameters (GlorotOrthogonal weights, zero biases), as in reset_params().
    w1 = glorot_orthogonal(kw1, (units, units))
    b1 = jnp.zeros((units,), jnp.float32)
    w2 = glorot_orthogonal(kw2, (units, units))
    b2 = jnp.zeros((units,), jnp.float32)

    activation = jax.nn.swish  # DimeNet-style; set to None for identity path.

    x2d = x.reshape(batch * seq, units)
    ref2d = residual_layer_ref(x2d, w1, b1, w2, b2, activation)

    # Exact-semantics path (f32 MXU operands, f32 activations, f32 residual).
    params_f32 = prepare_params(w1, b1, w2, b2, compute_dtype=jnp.float32)
    out_f32 = residual_layer(x2d, params_f32, activation=activation)
    jax.block_until_ready(out_f32)
    assert jnp.allclose(out_f32, ref2d, atol=2e-3, rtol=2e-3), "f32 path mismatch"

    # Fast path: bf16 MXU operands, f32 accumulation / bias / residual,
    # activation dtype picked per chip generation (bf16 on v6e/v7x, f32 on v5e).
    params_bf16 = prepare_params(w1, b1, w2, b2, compute_dtype=jnp.bfloat16)
    out2d = residual_layer(x2d, params_bf16, activation=activation)
    jax.block_until_ready(out2d)
    assert jnp.allclose(out2d, ref2d, atol=5e-2, rtol=5e-2), "bf16 path mismatch"

    out = out2d.reshape(batch, seq, units)
    jax.block_until_ready(out)
    print("KERNEL_OK")
</pallas_src>

<mosaic_0001>
module attributes {stable_mosaic.version = 11 : i64} {
  func.func @_residual_kernel(%arg0: i32, %arg1: memref<16x128xf32, #tpu.memory_space<vmem>>, %arg2: memref<128x128xf32, #tpu.memory_space<vmem>>, %arg3: memref<1x128xf32, #tpu.memory_space<vmem>>, %arg4: memref<128x128xf32, #tpu.memory_space<vmem>>, %arg5: memref<1x128xf32, #tpu.memory_space<vmem>>, %arg6: memref<16x128xf32, #tpu.memory_space<vmem>>) attributes {dimension_semantics = [#tpu.dimension_semantics<parallel>], iteration_bounds = array<i64: 1>, scalar_prefetch = 0 : i64, scratch_operands = 0 : i64, tpu.core_type = #tpu.core_type<tc>, window_params = [{transform_indices = @transform_0, window_bounds = array<i64: 16, 128>}, {pipeline_mode = #tpu.pipeline_mode<synchronous>, transform_indices = @transform_1, window_bounds = array<i64: 128, 128>}, {pipeline_mode = #tpu.pipeline_mode<synchronous>, transform_indices = @transform_2, window_bounds = array<i64: 1, 128>}, {pipeline_mode = #tpu.pipeline_mode<synchronous>, transform_indices = @transform_3, window_bounds = array<i64: 128, 128>}, {pipeline_mode = #tpu.pipeline_mode<synchronous>, transform_indices = @transform_4, window_bounds = array<i64: 1, 128>}, {transform_indices = @transform_5, window_bounds = array<i64: 16, 128>}]} {
    %c0 = arith.constant 0 : index
    %c0_0 = arith.constant 0 : index
    %0 = vector.load %arg1[%c0, %c0_0] : memref<16x128xf32, #tpu.memory_space<vmem>>, vector<16x128xf32>
    %c0_1 = arith.constant 0 : index
    %c0_2 = arith.constant 0 : index
    %1 = vector.load %arg2[%c0_1, %c0_2] : memref<128x128xf32, #tpu.memory_space<vmem>>, vector<128x128xf32>
    %cst = arith.constant dense<0.000000e+00> : vector<16x128xf32>
    %2 = tpu.matmul %0, %1, %cst {dimension_numbers = #tpu.dot_dimension_numbers<[1], [0], [0], [1], [0, 0, 1, 1], [], []>} : vector<16x128xf32>, vector<128x128xf32>, vector<16x128xf32> -> vector<16x128xf32>
    %c0_3 = arith.constant 0 : index
    %c0_4 = arith.constant 0 : index
    %3 = vector.load %arg3[%c0_3, %c0_4] : memref<1x128xf32, #tpu.memory_space<vmem>>, vector<1x128xf32>
    %4 = vector.broadcast %3 : vector<1x128xf32> to vector<16x128xf32>
    %5 = arith.addf %2, %4 : vector<16x128xf32>
    %6 = arith.negf %5 : vector<16x128xf32>
    %7 = math.exp %6 : vector<16x128xf32>
    %cst_5 = arith.constant 1.000000e+00 : f32
    %8 = vector.broadcast %cst_5 : f32 to vector<16x128xf32>
    %9 = arith.addf %8, %7 : vector<16x128xf32>
    %10 = arith.divf %8, %9 : vector<16x128xf32>
    %11 = arith.mulf %5, %10 : vector<16x128xf32>
    %c0_6 = arith.constant 0 : index
    %c0_7 = arith.constant 0 : index
    %12 = vector.load %arg4[%c0_6, %c0_7] : memref<128x128xf32, #tpu.memory_space<vmem>>, vector<128x128xf32>
    %cst_8 = arith.constant dense<0.000000e+00> : vector<16x128xf32>
    %13 = tpu.matmul %11, %12, %cst_8 {dimension_numbers = #tpu.dot_dimension_numbers<[1], [0], [0], [1], [0, 0, 1, 1], [], []>} : vector<16x128xf32>, vector<128x128xf32>, vector<16x128xf32> -> vector<16x128xf32>
    %c0_9 = arith.constant 0 : index
    %c0_10 = arith.constant 0 : index
    %14 = vector.load %arg5[%c0_9, %c0_10] : memref<1x128xf32, #tpu.memory_space<vmem>>, vector<1x128xf32>
    %15 = vector.broadcast %14 : vector<1x128xf32> to vector<16x128xf32>
    %16 = arith.addf %13, %15 : vector<16x128xf32>
    %17 = arith.negf %16 : vector<16x128xf32>
    %18 = math.exp %17 : vector<16x128xf32>
    %cst_11 = arith.constant 1.000000e+00 : f32
    %19 = vector.broadcast %cst_11 : f32 to vector<16x128xf32>
    %20 = arith.addf %19, %18 : vector<16x128xf32>
    %21 = arith.divf %19, %20 : vector<16x128xf32>
    %22 = arith.mulf %16, %21 : vector<16x128xf32>
    %c0_12 = arith.constant 0 : index
    %c0_13 = arith.constant 0 : index
    %23 = vector.load %arg1[%c0_12, %c0_13] : memref<16x128xf32, #tpu.memory_space<vmem>>, vector<16x128xf32>
    %24 = arith.addf %23, %22 : vector<16x128xf32>
    %c0_14 = arith.constant 0 : index
    %c0_15 = arith.constant 0 : index
    %25 = vector.load %arg6[%c0_14, %c0_15] : memref<16x128xf32, #tpu.memory_space<vmem>>, vector<16x128xf32>
    tpu.vector_store %arg6[%c0_14, %c0_15], %24 {strides = array<i32>} : memref<16x128xf32, #tpu.memory_space<vmem>>, vector<16x128xf32>,
    return
  }
  func.func @transform_0(%arg0: i32) -> (i32, i32) {
    %c0_i32 = arith.constant 0 : i32
    %c0_i32_0 = arith.constant 0 : i32
    return %arg0, %c0_i32 : i32, i32
  }
  func.func @transform_1(%arg0: i32) -> (i32, i32) {
    %c0_i32 = arith.constant 0 : i32
    %c0_i32_0 = arith.constant 0 : i32
    %c0_i32_1 = arith.constant 0 : i32
    return %c0_i32, %c0_i32_0 : i32, i32
  }
  func.func @transform_2(%arg0: i32) -> (i32, i32) {
    %c0_i32 = arith.constant 0 : i32
    %c0_i32_0 = arith.constant 0 : i32
    %c0_i32_1 = arith.constant 0 : i32
    return %c0_i32, %c0_i32_0 : i32, i32
  }
  func.func @transform_3(%arg0: i32) -> (i32, i32) {
    %c0_i32 = arith.constant 0 : i32
    %c0_i32_0 = arith.constant 0 : i32
    %c0_i32_1 = arith.constant 0 : i32
    return %c0_i32, %c0_i32_0 : i32, i32
  }
  func.func @transform_4(%arg0: i32) -> (i32, i32) {
    %c0_i32 = arith.constant 0 : i32
    %c0_i32_0 = arith.constant 0 : i32
    %c0_i32_1 = arith.constant 0 : i32
    return %c0_i32, %c0_i32_0 : i32, i32
  }
  func.func @transform_5(%arg0: i32) -> (i32, i32) {
    %c0_i32 = arith.constant 0 : i32
    %c0_i32_0 = arith.constant 0 : i32
    return %arg0, %c0_i32 : i32, i32
  }
}

</mosaic_0001>

<llo_original>
// kernel: tpu_custom_call.1
$region0: #{tpu_custom_call.1}
  #allocation0 [shape = 'u32[]', space=smem, size = 0x4, offset = 0x4, fixed_abs, tag = 'smem constant byte address 0x4 - core index']
  #allocation1 [shape = 'u32[144,128]{1,0:T(1,128)}', space=vmem, size = 0x12000, scoped, tag = 'internal scratch']
  %s0 = inlined_call_operand.hbm [shape: f32[16,128], index: 0, kind: input, shape index: {}]
  %s1 = inlined_call_operand.hbm [shape: f32[128,128], index: 1, kind: input, shape index: {}]
  %s2 = inlined_call_operand.vmem [shape: f32[1,128], index: 2, kind: input, shape index: {}]
  %s3 = inlined_call_operand.hbm [shape: f32[128,128], index: 3, kind: input, shape index: {}]
  %s4 = inlined_call_operand.vmem [shape: f32[1,128], index: 4, kind: input, shape index: {}]
  %s5 = inlined_call_operand.hbm [shape: f32[16,128], index: 5, kind: output, shape index: {}]
  %s6 = sld [smem:[#allocation0]]
  $region42: #{tpu_custom_call.1} parent=0
    _
  %s8 = ssub.s32 1, %s6
  %s9 = scalar_select 0, %s8, %s6
  $region1: #{tpu_custom_call.1} parent=0
    #allocation2 [shape = 'u8[8192]{0}', space=vmem, size = 0x2000, scoped, tag = 'input window, operand 0, single buffered']
    #allocation3 [shape = 's32[1]{0}', space=sflag, size = 0x4, scoped, tag = 'scoped memory for tpu_custom_call.1']
    #allocation4 [shape = 's32[1]{0}', space=sflag, size = 0x4, scoped, tag = 'scoped memory for tpu_custom_call.1']
    #allocation5 [shape = 'u8[65536]{0}', space=vmem, size = 0x10000, scoped, tag = 'input window, operand 1, single buffered']
    #allocation6 [shape = 's32[1]{0}', space=sflag, size = 0x4, scoped, tag = 'scoped memory for tpu_custom_call.1']
    #allocation7 [shape = 'u8[65536]{0}', space=vmem, size = 0x10000, scoped, tag = 'input window, operand 3, single buffered']
    #allocation8 [shape = 'u8[8192]{0}', space=vmem, size = 0x2000, scoped, tag = 'output window, operand 0, single buffered']
    %10 = vsyncpa [#allocation3], 0
    %11 = vsyncpa [#allocation6], 0
    %12 = vsyncpa [#allocation4], 0
    // Predicated region
    $region2: #{tpu_custom_call.1} parent=1 // pred_check
      _
    $region3: #{tpu_custom_call.1} parent=1 // pred_check_branch
      %14 = sbr.rel (0) target = $region5
    $region4: #{tpu_custom_call.1} parent=1 // pred_region
      %s16 = ssub.s32 256, 256
      %17 = vsyncadd [#allocation3], %s16
      %s18 = sshll.u32 [#allocation2], 4
      %s19 = int_to_ptr.vmem [resolvable:$true] %s18
      %24 = dma.hbm_to_vmem [thread:$0]  %s0, 256, %s19, [#allocation3], 128, 128, 8
    $region5: #{tpu_custom_call.1} parent=1 // pred_fallthru
      _
    // Predicated region
    $region6: #{tpu_custom_call.1} parent=1 // pred_check
      _
    $region7: #{tpu_custom_call.1} parent=1 // pred_check_branch
      %26 = sbr.rel (0) target = $region9
    $region8: #{tpu_custom_call.1} parent=1 // pred_region
      %s28 = ssub.s32 2048, 2048
      %29 = vsyncadd [#allocation6], %s28
      %s30 = sshll.u32 [#allocation5], 4
      %s31 = int_to_ptr.vmem [resolvable:$true] %s30
      %36 = dma.hbm_to_vmem [thread:$0]  %s1, 2048, %s31, [#allocation6], 128, 128, 8
    $region9: #{tpu_custom_call.1} parent=1 // pred_fallthru
      _
    // Predicated region
    $region10: #{tpu_custom_call.1} parent=1 // pred_check
      _
    $region11: #{tpu_custom_call.1} parent=1 // pred_check_branch
      %38 = sbr.rel (0) target = $region13
    $region12: #{tpu_custom_call.1} parent=1 // pred_region
      _
    $region13: #{tpu_custom_call.1} parent=1 // pred_fallthru
      _
    // Predicated region
    $region14: #{tpu_custom_call.1} parent=1 // pred_check
      _
    $region15: #{tpu_custom_call.1} parent=1 // pred_check_branch
      %40 = sbr.rel (0) target = $region17
    $region16: #{tpu_custom_call.1} parent=1 // pred_region
      %s42 = ssub.s32 2048, 2048
      %43 = vsyncadd [#allocation6], %s42
      %s44 = sshll.u32 [#allocation7], 4
      %s45 = int_to_ptr.vmem [resolvable:$true] %s44
      %50 = dma.hbm_to_vmem [thread:$0]  %s3, 2048, %s45, [#allocation6], 128, 128, 8
    $region17: #{tpu_custom_call.1} parent=1 // pred_fallthru
      _
    // Predicated region
    $region18: #{tpu_custom_call.1} parent=1 // pred_check
      _
    $region19: #{tpu_custom_call.1} parent=1 // pred_check_branch
      %52 = sbr.rel (0) target = $region21
    $region20: #{tpu_custom_call.1} parent=1 // pred_region
      _
    $region21: #{tpu_custom_call.1} parent=1 // pred_fallthru
      _
    // Predicated region
    $region22: #{tpu_custom_call.1} parent=1 // pred_check
      _
    $region23: #{tpu_custom_call.1} parent=1 // pred_check_branch
      %54 = sbr.rel (0) target = $region25
    $region24: #{tpu_custom_call.1} parent=1 // pred_region
      %55 = dma.done [#allocation3], 256
    $region25: #{tpu_custom_call.1} parent=1 // pred_fallthru
      _
    // Predicated region
    $region26: #{tpu_custom_call.1} parent=1 // pred_check
      _
    $region27: #{tpu_custom_call.1} parent=1 // pred_check_branch
      %57 = sbr.rel (0) target = $region29
    $region28: #{tpu_custom_call.1} parent=1 // pred_region
      %58 = dma.done [#allocation6], 2048
    $region29: #{tpu_custom_call.1} parent=1 // pred_fallthru
      _
    // Predicated region
    $region30: #{tpu_custom_call.1} parent=1 // pred_check
      _
    $region31: #{tpu_custom_call.1} parent=1 // pred_check_branch
      %60 = sbr.rel (0) target = $region33
    $region32: #{tpu_custom_call.1} parent=1 // pred_region
      %61 = dma.done [#allocation6], 2048
    $region33: #{tpu_custom_call.1} parent=1 // pred_fallthru
      _
    %v62 = vld [vmem:[#allocation2] sm:$0xff]
    %v63 = vld [vmem:[#allocation2 + $0x8] sm:$0xff]
    %v64 = vld [vmem:[#allocation5] sm:$0xff]
    %v65 = vld [vmem:[#allocation5 + $0x8] sm:$0xff]
    %v66 = vld [vmem:[#allocation5 + $0x10] sm:$0xff]
    %v67 = vld [vmem:[#allocation5 + $0x18] sm:$0xff]
    %v68 = vld [vmem:[#allocation5 + $0x20] sm:$0xff]
    %v69 = vld [vmem:[#allocation5 + $0x28] sm:$0xff]
    %v70 = vld [vmem:[#allocation5 + $0x30] sm:$0xff]
    %v71 = vld [vmem:[#allocation5 + $0x38] sm:$0xff]
    %v72 = vld [vmem:[#allocation5 + $0x40] sm:$0xff]
    %v73 = vld [vmem:[#allocation5 + $0x48] sm:$0xff]
    %v74 = vld [vmem:[#allocation5 + $0x50] sm:$0xff]
    %v75 = vld [vmem:[#allocation5 + $0x58] sm:$0xff]
    %v76 = vld [vmem:[#allocation5 + $0x60] sm:$0xff]
    %v77 = vld [vmem:[#allocation5 + $0x68] sm:$0xff]
    %v78 = vld [vmem:[#allocation5 + $0x70] sm:$0xff]
    %v79 = vld [vmem:[#allocation5 + $0x78] sm:$0xff]
    %v80 = vld [vmem:[%s2] sm:$0x1]
    %v82 = vlaneseq
    %v83 = vshrl.u32 %v82, 7
    %v84 = vsub.s32 0, %v83
    %v85 = vrot.slane %v80, %v84
    %87 = vmatprep.subr.mxu0 0.0
    %88 = vmatpush1.msra.mxu0 %v79
    %89 = vmatprep.subr.mxu0 0.0
    %90 = vmatpush1.msra.mxu0 %v78
    %91 = vmatprep.subr.mxu0 0.0
    %92 = vmatpush1.msra.mxu0 %v77
    %93 = vmatprep.subr.mxu0 0.0
    %94 = vmatpush1.msra.mxu0 %v76
    %95 = vmatprep.subr.mxu0 0.0
    %96 = vmatpush1.msra.mxu0 %v75
    %97 = vmatprep.subr.mxu0 0.0
    %98 = vmatpush1.msra.mxu0 %v74
    %99 = vmatprep.subr.mxu0 0.0
    %100 = vmatpush1.msra.mxu0 %v73
    %101 = vmatprep.subr.mxu0 0.0
    %102 = vmatpush1.msra.mxu0 %v72
    %103 = vmatprep.subr.mxu0 0.0
    %104 = vmatpush1.msra.mxu0 %v71
    %105 = vmatprep.subr.mxu0 0.0
    %106 = vmatpush1.msra.mxu0 %v70
    %107 = vmatprep.subr.mxu0 0.0
    %108 = vmatpush1.msra.mxu0 %v69
    %109 = vmatprep.subr.mxu0 0.0
    %110 = vmatpush1.msra.mxu0 %v68
    %111 = vmatprep.subr.mxu0 0.0
    %112 = vmatpush1.msra.mxu0 %v67
    %113 = vmatprep.subr.mxu0 0.0
    %114 = vmatpush1.msra.mxu0 %v66
    %115 = vmatprep.subr.mxu0 0.0
    %116 = vmatpush1.msra.mxu0 %v65
    %117 = vmatprep.subr.mxu0 0.0
    %118 = vmatpush1.msra.mxu0 %v64
    %119 = vmatprep.subr.mxu0 0.0
    %120 = vmatpush2.msra.mxu0 0.0
    %121 = vmatprep.subr.mxu0 0.0
    %122 = vmatpush2.msra.mxu0 0.0
    %123 = vmatprep.subr.mxu0 0.0
    %124 = vmatpush2.msra.mxu0 0.0
    %125 = vmatprep.subr.mxu0 0.0
    %126 = vmatpush2.msra.mxu0 0.0
    %127 = vmatprep.subr.mxu0 0.0
    %128 = vmatpush2.msra.mxu0 0.0
    %129 = vmatprep.subr.mxu0 0.0
    %130 = vmatpush2.msra.mxu0 0.0
    %131 = vmatprep.subr.mxu0 0.0
    %132 = vmatpush2.msra.mxu0 0.0
    %133 = vmatprep.subr.mxu0 0.0
    %134 = vmatpush2.msra.mxu0 0.0
    %135 = vmatprep.subr.mxu0 0.0
    %136 = vmatpush2.msra.mxu0 0.0
    %137 = vmatprep.subr.mxu0 0.0
    %138 = vmatpush2.msra.mxu0 0.0
    %139 = vmatprep.subr.mxu0 0.0
    %140 = vmatpush2.msra.mxu0 0.0
    %141 = vmatprep.subr.mxu0 0.0
    %142 = vmatpush2.msra.mxu0 0.0
    %143 = vmatprep.subr.mxu0 0.0
    %144 = vmatpush2.msra.mxu0 0.0
    %145 = vmatprep.subr.mxu0 0.0
    %146 = vmatpush2.msra.mxu0 0.0
    %147 = vmatprep.subr.mxu0 0.0
    %148 = vmatpush2.msra.mxu0 0.0
    %149 = vmatprep.subr.mxu0 0.0
    %150 = vmatpush2.msra.mxu0 0.0
    %151 = vmatprep.mubr.f32.mxu0 0.0
    %152 = vmatmul.mubr.f32.gmra.mxu0 %v62
    %v153 = vpop.f32.mrf.mxu0
    %v154 = vadd.f32 %v85, %v153
    %v155 = vpop.f32.mrf.mxu0
    %156 = vmatprep.mubr.f32.mxu0 0.0
    %157 = vmatmul.mubr.f32.gmra.mxu0 %v63
    %v158 = vpop.f32.mrf.mxu0
    %v159 = vadd.f32 %v85, %v158
    %v160 = vpop.f32.mrf.mxu0
    %161 = vdwg.mxu0
    %v162 = vxor.u32 %v154, 2147483648
    %v163 = vxor.u32 %v159, 2147483648
    %v164 = vmul.f32 %v162, 1.442695
    %v165 = vpow.pop %v164
    %v166 = vmul.f32 %v163, 1.442695
    %v167 = vpow.pop %v166
    %v168 = vadd.f32 %v165, 1.0
    %v169 = vadd.f32 %v167, 1.0
    %v170 = vrcp.pop %v168
    %v171 = vmul.f32 1.0, %v170
    %v172 = vrcp.pop %v169
    %v173 = vmul.f32 1.0, %v172
    %v174 = vmul.f32 %v154, %v171
    %v175 = vmul.f32 %v159, %v173
    %v176 = vld [vmem:[#allocation7] sm:$0xff]
    %v177 = vld [vmem:[#allocation7 + $0x8] sm:$0xff]
    %v178 = vld [vmem:[#allocation7 + $0x10] sm:$0xff]
    %v179 = vld [vmem:[#allocation7 + $0x18] sm:$0xff]
    %v180 = vld [vmem:[#allocation7 + $0x20] sm:$0xff]
    %v181 = vld [vmem:[#allocation7 + $0x28] sm:$0xff]
    %v182 = vld [vmem:[#allocation7 + $0x30] sm:$0xff]
    %v183 = vld [vmem:[#allocation7 + $0x38] sm:$0xff]
    %v184 = vld [vmem:[#allocation7 + $0x40] sm:$0xff]
    %v185 = vld [vmem:[#allocation7 + $0x48] sm:$0xff]
    %v186 = vld [vmem:[#allocation7 + $0x50] sm:$0xff]
    %v187 = vld [vmem:[#allocation7 + $0x58] sm:$0xff]
    %v188 = vld [vmem:[#allocation7 + $0x60] sm:$0xff]
    %v189 = vld [vmem:[#allocation7 + $0x68] sm:$0xff]
    %v190 = vld [vmem:[#allocation7 + $0x70] sm:$0xff]
    %v191 = vld [vmem:[#allocation7 + $0x78] sm:$0xff]
    %v192 = vld [vmem:[%s4] sm:$0x1]
    %v194 = vlaneseq
    %v195 = vshrl.u32 %v194, 7
    %v196 = vsub.s32 0, %v195
    %v197 = vrot.slane %v192, %v196
    %199 = vmatprep.subr.mxu0 0.0
    %200 = vmatpush1.msra.mxu0 %v191
    %201 = vmatprep.subr.mxu0 0.0
    %202 = vmatpush1.msra.mxu0 %v190
    %203 = vmatprep.subr.mxu0 0.0
    %204 = vmatpush1.msra.mxu0 %v189
    %205 = vmatprep.subr.mxu0 0.0
    %206 = vmatpush1.msra.mxu0 %v188
    %207 = vmatprep.subr.mxu0 0.0
    %208 = vmatpush1.msra.mxu0 %v187
    %209 = vmatprep.subr.mxu0 0.0
    %210 = vmatpush1.msra.mxu0 %v186
    %211 = vmatprep.subr.mxu0 0.0
    %212 = vmatpush1.msra.mxu0 %v185
    %213 = vmatprep.subr.mxu0 0.0
    %214 = vmatpush1.msra.mxu0 %v184
    %215 = vmatprep.subr.mxu0 0.0
    %216 = vmatpush1.msra.mxu0 %v183
    %217 = vmatprep.subr.mxu0 0.0
    %218 = vmatpush1.msra.mxu0 %v182
    %219 = vmatprep.subr.mxu0 0.0
    %220 = vmatpush1.msra.mxu0 %v181
    %221 = vmatprep.subr.mxu0 0.0
    %222 = vmatpush1.msra.mxu0 %v180
    %223 = vmatprep.subr.mxu0 0.0
    %224 = vmatpush1.msra.mxu0 %v179
    %225 = vmatprep.subr.mxu0 0.0
    %226 = vmatpush1.msra.mxu0 %v178
    %227 = vmatprep.subr.mxu0 0.0
    %228 = vmatpush1.msra.mxu0 %v177
    %229 = vmatprep.subr.mxu0 0.0
    %230 = vmatpush1.msra.mxu0 %v176
    %231 = vmatprep.subr.mxu0 0.0
    %232 = vmatpush2.msra.mxu0 0.0
    %233 = vmatprep.subr.mxu0 0.0
    %234 = vmatpush2.msra.mxu0 0.0
    %235 = vmatprep.subr.mxu0 0.0
    %236 = vmatpush2.msra.mxu0 0.0
    %237 = vmatprep.subr.mxu0 0.0
    %238 = vmatpush2.msra.mxu0 0.0
    %239 = vmatprep.subr.mxu0 0.0
    %240 = vmatpush2.msra.mxu0 0.0
    %241 = vmatprep.subr.mxu0 0.0
    %242 = vmatpush2.msra.mxu0 0.0
    %243 = vmatprep.subr.mxu0 0.0
    %244 = vmatpush2.msra.mxu0 0.0
    %245 = vmatprep.subr.mxu0 0.0
    %246 = vmatpush2.msra.mxu0 0.0
    %247 = vmatprep.subr.mxu0 0.0
    %248 = vmatpush2.msra.mxu0 0.0
    %249 = vmatprep.subr.mxu0 0.0
    %250 = vmatpush2.msra.mxu0 0.0
    %251 = vmatprep.subr.mxu0 0.0
    %252 = vmatpush2.msra.mxu0 0.0
    %253 = vmatprep.subr.mxu0 0.0
    %254 = vmatpush2.msra.mxu0 0.0
    %255 = vmatprep.subr.mxu0 0.0
    %256 = vmatpush2.msra.mxu0 0.0
    %257 = vmatprep.subr.mxu0 0.0
    %258 = vmatpush2.msra.mxu0 0.0
    %259 = vmatprep.subr.mxu0 0.0
    %260 = vmatpush2.msra.mxu0 0.0
    %261 = vmatprep.subr.mxu0 0.0
    %262 = vmatpush2.msra.mxu0 0.0
    %263 = vmatprep.mubr.f32.mxu0 0.0
    %264 = vmatmul.mubr.f32.gmra.mxu0 %v174
    %v265 = vpop.f32.mrf.mxu0
    %v266 = vadd.f32 %v197, %v265
    %v267 = vpop.f32.mrf.mxu0
    %268 = vmatprep.mubr.f32.mxu0 0.0
    %269 = vmatmul.mubr.f32.gmra.mxu0 %v175
    %v270 = vpop.f32.mrf.mxu0
    %v271 = vadd.f32 %v197, %v270
    %v272 = vpop.f32.mrf.mxu0
    %273 = vdwg.mxu0
    %v274 = vxor.u32 %v266, 2147483648
    %v275 = vxor.u32 %v271, 2147483648
    %v276 = vmul.f32 %v274, 1.442695
    %v277 = vpow.pop %v276
    %v278 = vmul.f32 %v275, 1.442695
    %v279 = vpow.pop %v278
    %v280 = vadd.f32 %v277, 1.0
    %v281 = vadd.f32 %v279, 1.0
    %v282 = vrcp.pop %v280
    %v283 = vmul.f32 1.0, %v282
    %v284 = vrcp.pop %v281
    %v285 = vmul.f32 1.0, %v284
    %v286 = vmul.f32 %v266, %v283
    %v287 = vmul.f32 %v271, %v285
    %v288 = vadd.f32 %v62, %v286
    %v289 = vadd.f32 %v63, %v287
    %290 = vst [vmem:[#allocation8] sm:$0xff] %v288
    %291 = vst [vmem:[#allocation8 + $0x8] sm:$0xff] %v289
    // Predicated region
    $region34: #{tpu_custom_call.1} parent=1 // pred_check
      _
    $region35: #{tpu_custom_call.1} parent=1 // pred_check_branch
      %293 = sbr.rel (0) target = $region37
    $region36: #{tpu_custom_call.1} parent=1 // pred_region
      %s295 = ssub.s32 256, 256
      %296 = vsyncadd [#allocation4], %s295
      %s297 = sshll.u32 [#allocation8], 4
      %s298 = int_to_ptr.vmem [resolvable:$true] %s297
      %303 = dma.vmem_to_hbm [thread:$0]  %s298, 256, %s5, [#allocation4], 128, 128, 8
    $region37: #{tpu_custom_call.1} parent=1 // pred_fallthru
      _
    // Predicated region
    $region38: #{tpu_custom_call.1} parent=1 // pred_check
      _
    $region39: #{tpu_custom_call.1} parent=1 // pred_check_branch
      %305 = sbr.rel (0) target = $region41
    $region40: #{tpu_custom_call.1} parent=1 // pred_region
      %306 = dma.done [#allocation4], 256
    $region41: #{tpu_custom_call.1} parent=1 // pred_fallthru
      _
    %307 = vsyncpa [#allocation3], 1
    %308 = vsyncpa [#allocation6], 1
    %309 = vsyncpa [#allocation4], 1

</llo_original>
